<compile_context>
chip_gen: v7x
topology: tpu7x:2x2x1
jax: 0.10.0
libtpu: 0.0.40
codegen_flags: <defaults>
</compile_context>

<pallas_src>
import functools

import jax
import jax.numpy as jnp
from jax.experimental import pallas as pl
from jax.experimental.pallas import tpu as pltpu


# ----------------------------------------------------------------------------
# Helpers
# ----------------------------------------------------------------------------
def _round_up(x, m):
    return ((x + m - 1) // m) * m


def _sublane_multiple(dtype):
    # Native packed sublane count: 8 for 4-byte, 16 for 2-byte, 32 for 1-byte.
    itemsize = jnp.dtype(dtype).itemsize
    return max(8, 32 // itemsize)


# ----------------------------------------------------------------------------
# Kernels
# ----------------------------------------------------------------------------
def _ln_math(x, g_ref, b_ref, o_ref, eps, valid_h):
    """Shared LayerNorm math. Stats in f32, two-pass biased variance (PyTorch)."""
    x = x.astype(jnp.float32)
    hp = x.shape[-1]
    inv_h = 1.0 / float(valid_h)
    if valid_h != hp:
        # H was padded to a multiple of 128 in the wrapper: mask the pad lanes
        # out of the statistics so mean/variance are over the real H only.
        lane = jax.lax.broadcasted_iota(jnp.int32, (1, hp), 1)
        mask = lane < valid_h
        x = jnp.where(mask, x, 0.0)
        u = jnp.sum(x, axis=-1, keepdims=True) * inv_h
        d = jnp.where(mask, x - u, 0.0)
    else:
        u = jnp.sum(x, axis=-1, keepdims=True) * inv_h
        d = x - u
    s = jnp.sum(d * d, axis=-1, keepdims=True) * inv_h     # biased variance
    xn = d * jax.lax.rsqrt(s + eps)                         # rsqrt -> EUP slot
    g = g_ref[...].astype(jnp.float32)
    b = b_ref[...].astype(jnp.float32)
    o_ref[...] = (g * xn + b).astype(o_ref.dtype)


def _layernorm_kernel(x_ref, g_ref, b_ref, o_ref, *, eps, valid_h):
    _ln_math(x_ref[...], g_ref, b_ref, o_ref, eps, valid_h)


def _layernorm_residual_kernel(x_ref, r_ref, g_ref, b_ref, o_ref, *, eps, valid_h):
    # Residual add fused in-kernel: saves one full HBM read+write of the activation.
    xr = x_ref[...].astype(jnp.float32) + r_ref[...].astype(jnp.float32)
    _ln_math(xr, g_ref, b_ref, o_ref, eps, valid_h)


# ----------------------------------------------------------------------------
# Wrapper
# ----------------------------------------------------------------------------
def bert_layernorm(x, gamma, beta, *, eps=1e-12, residual=None,
                   target_block_bytes=4 << 20, vmem_budget_bytes=40 << 20):
    """BertLayerNorm forward.

    x: (..., H); gamma, beta: (H,); optional residual of x's shape is added
    before normalization (fused).  Matches:
        u = x.mean(-1); s = (x-u).pow(2).mean(-1)
        weight * (x-u)/sqrt(s+eps) + bias
    """
    orig_shape = x.shape
    H = orig_shape[-1]
    M = 1
    for d in orig_shape[:-1]:
        M *= d
    x2 = x.reshape(M, H)
    r2 = residual.reshape(M, H) if residual is not None else None

    # Lane-dense padding of H (no-op for 128-aligned BERT hidden sizes).
    Hp = _round_up(H, 128)
    if Hp != H:
        x2 = jnp.pad(x2, ((0, 0), (0, Hp - H)))
        if r2 is not None:
            r2 = jnp.pad(r2, ((0, 0), (0, Hp - H)))
        gamma = jnp.pad(gamma, (0, Hp - H))
        beta = jnp.pad(beta, (0, Hp - H))

    g2 = gamma.reshape(1, Hp)          # original dtype; cast inside the kernel
    b2 = beta.reshape(1, Hp)

    itemsize = jnp.dtype(x.dtype).itemsize
    sub = _sublane_multiple(x.dtype)
    n_row_streams = (2 if residual is not None else 1) + 1   # inputs + output

    # --- Tile sizing: by bytes, under an explicit VMEM budget -----------------
    # Per-row VMEM cost: double-buffered row streams + ~3 full-tile f32
    # temporaries (f32 copy of x, centered d, products) for the two-pass stats.
    per_row_buf = n_row_streams * 2 * Hp * itemsize
    per_row_tmp = 3 * Hp * 4
    tm_by_bytes = max(sub, target_block_bytes // (Hp * itemsize))
    tm_by_vmem = max(sub, vmem_budget_bytes // (per_row_buf + per_row_tmp))
    tm = min(tm_by_bytes, tm_by_vmem, _round_up(M, sub))
    tm = max(sub, (tm // sub) * sub)

    grid = (pl.cdiv(M, tm),)

    row_spec = pl.BlockSpec((tm, Hp), lambda i: (i, 0))
    vec_spec = pl.BlockSpec((1, Hp), lambda i: (0, 0))   # resident, no re-DMA

    if residual is None:
        kernel = functools.partial(_layernorm_kernel, eps=eps, valid_h=H)
        in_specs = [row_spec, vec_spec, vec_spec]
        args = (x2, g2, b2)
    else:
        kernel = functools.partial(_layernorm_residual_kernel, eps=eps, valid_h=H)
        in_specs = [row_spec, row_spec, vec_spec, vec_spec]
        args = (x2, r2, g2, b2)

    # Explicit VMEM limit: computed need + headroom, floored at 32 MiB so we
    # never shrink the compiler's default, capped at 48 MiB (safe on v7x's
    # 64 MiB physical VMEM; well under v5e/v6e's 128 MiB).
    vmem_need = tm * (per_row_buf + per_row_tmp) + 4 * Hp * 4
    vmem_limit = int(min(48 << 20, max(32 << 20, vmem_need + (8 << 20))))

    out = pl.pallas_call(
        kernel,
        out_shape=jax.ShapeDtypeStruct((M, Hp), x.dtype),
        grid_spec=pltpu.PrefetchScalarGridSpec(
            num_scalar_prefetch=0,
            grid=grid,
            in_specs=in_specs,
            out_specs=row_spec,
        ),
        compiler_params=pltpu.CompilerParams(
            dimension_semantics=("parallel",),
            vmem_limit_bytes=vmem_limit),
    )(*args)

    if Hp != H:
        out = out[:, :H]
    return out.reshape(orig_shape)


# ----------------------------------------------------------------------------
# Pure-JAX reference (mirrors the PyTorch module)
# ----------------------------------------------------------------------------
def _layernorm_ref(x, gamma, beta, eps=1e-12, residual=None):
    if residual is not None:
        x = x + residual
    x = x.astype(jnp.float32)
    u = jnp.mean(x, axis=-1, keepdims=True)
    s = jnp.mean((x - u) ** 2, axis=-1, keepdims=True)
    return gamma.astype(jnp.float32) * (x - u) / jnp.sqrt(s + eps) + beta.astype(jnp.float32)


# ----------------------------------------------------------------------------
if __name__ == "__main__":
    key = jax.random.PRNGKey(0)
    k1, k2, k3, k4, k5, k6 = jax.random.split(key, 6)

    # ---- Case 1: f32, 128-aligned H, ragged row count (260 rows) ------------
    B, S, H = 2, 130, 256
    x = jax.random.normal(k1, (B, S, H), jnp.float32)
    res = jax.random.normal(k2, (B, S, H), jnp.float32)
    gamma = 1.0 + 0.1 * jax.random.normal(k3, (H,), jnp.float32)
    beta = 0.1 * jax.random.normal(k4, (H,), jnp.float32)

    fwd = jax.jit(lambda a, g, b: bert_layernorm(a, g, b, eps=1e-12))
    y = jax.block_until_ready(fwd(x, gamma, beta))
    y_ref = _layernorm_ref(x, gamma, beta)
    assert y.shape == x.shape
    assert bool(jnp.all(jnp.isfinite(y)))
    assert float(jnp.max(jnp.abs(y - y_ref))) < 1e-4

    # Fused-residual variant (as used by the surrounding TopicNet GPP layer).
    fwd_res = jax.jit(lambda a, r, g, b: bert_layernorm(a, g, b, eps=1e-12,
                                                        residual=r))
    y2 = jax.block_until_ready(fwd_res(x, res, gamma, beta))
    y2_ref = _layernorm_ref(x, gamma, beta, residual=res)
    assert y2.shape == x.shape
    assert bool(jnp.all(jnp.isfinite(y2)))
    assert float(jnp.max(jnp.abs(y2 - y2_ref))) < 1e-4

    # ---- Case 2: bf16 input (exercises 16-row sublane rounding) -------------
    xb = jax.random.normal(k5, (2, 65, 256), jnp.float32).astype(jnp.bfloat16)
    yb = jax.block_until_ready(fwd(xb, gamma, beta))
    yb_ref = _layernorm_ref(xb.astype(jnp.float32), gamma, beta)
    assert yb.shape == xb.shape
    assert bool(jnp.all(jnp.isfinite(yb.astype(jnp.float32))))
    assert float(jnp.max(jnp.abs(yb.astype(jnp.float32) - yb_ref))) < 5e-2

    # ---- Case 3: non-128-multiple H (exercises lane-padded masked stats) ----
    Hn = 200
    xn = jax.random.normal(k6, (2, 40, Hn), jnp.float32)
    gn = jnp.ones((Hn,), jnp.float32)
    bn = jnp.zeros((Hn,), jnp.float32)
    yn = jax.block_until_ready(fwd(xn, gn, bn))
    yn_ref = _layernorm_ref(xn, gn, bn)
    assert yn.shape == xn.shape
    assert bool(jnp.all(jnp.isfinite(yn)))
    assert float(jnp.max(jnp.abs(yn - yn_ref))) < 1e-4

    print("KERNEL_OK")
</pallas_src>

<mosaic_0001>
module attributes {stable_mosaic.version = 11 : i64} {
  func.func @_layernorm_kernel(%arg0: i32, %arg1: memref<264x256xf32, #tpu.memory_space<vmem>>, %arg2: memref<1x256xf32, #tpu.memory_space<vmem>>, %arg3: memref<1x256xf32, #tpu.memory_space<vmem>>, %arg4: memref<264x256xf32, #tpu.memory_space<vmem>>) attributes {dimension_semantics = [#tpu.dimension_semantics<parallel>], iteration_bounds = array<i64: 1>, scalar_prefetch = 0 : i64, scratch_operands = 0 : i64, tpu.core_type = #tpu.core_type<tc>, window_params = [{transform_indices = @transform_0, window_bounds = array<i64: 264, 256>}, {pipeline_mode = #tpu.pipeline_mode<synchronous>, transform_indices = @transform_1, window_bounds = array<i64: 1, 256>}, {pipeline_mode = #tpu.pipeline_mode<synchronous>, transform_indices = @transform_2, window_bounds = array<i64: 1, 256>}, {transform_indices = @transform_3, window_bounds = array<i64: 264, 256>}]} {
    %c0 = arith.constant 0 : index
    %c0_0 = arith.constant 0 : index
    %0 = vector.load %arg1[%c0, %c0_0] : memref<264x256xf32, #tpu.memory_space<vmem>>, vector<264x256xf32>
    %cst = arith.constant dense<0.000000e+00> : vector<264xf32>
    %1 = vector.multi_reduction <add>, %0, %cst [1] : vector<264x256xf32> to vector<264xf32>
    %2 = vector.shape_cast %1 : vector<264xf32> to vector<264x1xf32>
    %cst_1 = arith.constant 3.906250e-03 : f32
    %3 = vector.broadcast %cst_1 : f32 to vector<264x1xf32>
    %4 = arith.mulf %2, %3 : vector<264x1xf32>
    %5 = vector.broadcast %4 : vector<264x1xf32> to vector<264x256xf32>
    %6 = arith.subf %0, %5 : vector<264x256xf32>
    %7 = arith.mulf %6, %6 : vector<264x256xf32>
    %cst_2 = arith.constant dense<0.000000e+00> : vector<264xf32>
    %8 = vector.multi_reduction <add>, %7, %cst_2 [1] : vector<264x256xf32> to vector<264xf32>
    %9 = vector.shape_cast %8 : vector<264xf32> to vector<264x1xf32>
    %cst_3 = arith.constant 3.906250e-03 : f32
    %10 = vector.broadcast %cst_3 : f32 to vector<264x1xf32>
    %11 = arith.mulf %9, %10 : vector<264x1xf32>
    %cst_4 = arith.constant 9.99999996E-13 : f32
    %12 = vector.broadcast %cst_4 : f32 to vector<264x1xf32>
    %13 = arith.addf %11, %12 : vector<264x1xf32>
    %14 = math.rsqrt %13 : vector<264x1xf32>
    %15 = vector.broadcast %14 : vector<264x1xf32> to vector<264x256xf32>
    %16 = arith.mulf %6, %15 : vector<264x256xf32>
    %c0_5 = arith.constant 0 : index
    %c0_6 = arith.constant 0 : index
    %17 = vector.load %arg2[%c0_5, %c0_6] : memref<1x256xf32, #tpu.memory_space<vmem>>, vector<1x256xf32>
    %c0_7 = arith.constant 0 : index
    %c0_8 = arith.constant 0 : index
    %18 = vector.load %arg3[%c0_7, %c0_8] : memref<1x256xf32, #tpu.memory_space<vmem>>, vector<1x256xf32>
    %19 = vector.broadcast %17 : vector<1x256xf32> to vector<264x256xf32>
    %20 = arith.mulf %19, %16 : vector<264x256xf32>
    %21 = vector.broadcast %18 : vector<1x256xf32> to vector<264x256xf32>
    %22 = arith.addf %20, %21 : vector<264x256xf32>
    %c0_9 = arith.constant 0 : index
    %c0_10 = arith.constant 0 : index
    %23 = vector.load %arg4[%c0_9, %c0_10] : memref<264x256xf32, #tpu.memory_space<vmem>>, vector<264x256xf32>
    tpu.vector_store %arg4[%c0_9, %c0_10], %22 {strides = array<i32>} : memref<264x256xf32, #tpu.memory_space<vmem>>, vector<264x256xf32>,
    return
  }
  func.func @transform_0(%arg0: i32) -> (i32, i32) {
    %c0_i32 = arith.constant 0 : i32
    %c0_i32_0 = arith.constant 0 : i32
    return %arg0, %c0_i32 : i32, i32
  }
  func.func @transform_1(%arg0: i32) -> (i32, i32) {
    %c0_i32 = arith.constant 0 : i32
    %c0_i32_0 = arith.constant 0 : i32
    %c0_i32_1 = arith.constant 0 : i32
    return %c0_i32, %c0_i32_0 : i32, i32
  }
  func.func @transform_2(%arg0: i32) -> (i32, i32) {
    %c0_i32 = arith.constant 0 : i32
    %c0_i32_0 = arith.constant 0 : i32
    %c0_i32_1 = arith.constant 0 : i32
    return %c0_i32, %c0_i32_0 : i32, i32
  }
  func.func @transform_3(%arg0: i32) -> (i32, i32) {
    %c0_i32 = arith.constant 0 : i32
    %c0_i32_0 = arith.constant 0 : i32
    return %arg0, %c0_i32 : i32, i32
  }
}

</mosaic_0001>

<llo_original>
// kernel: _lambda_.1
$region0: #{_lambda_.1}
  #allocation0 [shape = 'u32[]', space=smem, size = 0x4, offset = 0x4, fixed_abs, tag = 'smem constant byte address 0x4 - core index']
  #allocation1 [shape = 'u32[144,128]{1,0:T(1,128)}', space=vmem, size = 0x12000, scoped, tag = 'internal scratch']
  %s0 = inlined_call_operand.vmem [shape: f32[260,256], index: 0, kind: input, shape index: {}]
  %s1 = inlined_call_operand.vmem [shape: f32[1,256], index: 1, kind: input, shape index: {}]
  %s2 = inlined_call_operand.vmem [shape: f32[1,256], index: 2, kind: input, shape index: {}]
  %s3 = inlined_call_operand.vmem [shape: f32[260,256], index: 3, kind: output, shape index: {}]
  %s4 = sld [smem:[#allocation0]]
  $region22: #{_lambda_.1} parent=0
    _
  %s6 = ssub.s32 1, %s4
  %s7 = scalar_select 0, %s6, %s4
  // Predicated region
  $region2: #{_lambda_.1} parent=0 // pred_check
    _
  $region3: #{_lambda_.1} parent=0 // pred_check_branch
    %9 = sbr.rel (0) target = $region5
  $region4: #{_lambda_.1} parent=0 // pred_region
    _
  $region5: #{_lambda_.1} parent=0 // pred_fallthru
    _
  // Predicated region
  $region6: #{_lambda_.1} parent=0 // pred_check
    _
  $region7: #{_lambda_.1} parent=0 // pred_check_branch
    %11 = sbr.rel (0) target = $region9
  $region8: #{_lambda_.1} parent=0 // pred_region
    _
  $region9: #{_lambda_.1} parent=0 // pred_fallthru
    _
  // Predicated region
  $region10: #{_lambda_.1} parent=0 // pred_check
    _
  $region11: #{_lambda_.1} parent=0 // pred_check_branch
    %13 = sbr.rel (0) target = $region13
  $region12: #{_lambda_.1} parent=0 // pred_region
    _
  $region13: #{_lambda_.1} parent=0 // pred_fallthru
    _
  %v14 = vld [vmem:[%s0] sm:$0xff]
  %v15 = vld [vmem:[%s0 + $0x8] sm:$0xff]
  %v16 = vld [vmem:[%s0 + $0x10] sm:$0xff]
  %v17 = vld [vmem:[%s0 + $0x18] sm:$0xff]
  %v18 = vld [vmem:[%s0 + $0x20] sm:$0xff]
  %v19 = vld [vmem:[%s0 + $0x28] sm:$0xff]
  %v20 = vld [vmem:[%s0 + $0x30] sm:$0xff]
  %v21 = vld [vmem:[%s0 + $0x38] sm:$0xff]
  %v22 = vld [vmem:[%s0 + $0x40] sm:$0xff]
  %v23 = vld [vmem:[%s0 + $0x48] sm:$0xff]
  %v24 = vld [vmem:[%s0 + $0x50] sm:$0xff]
  %v25 = vld [vmem:[%s0 + $0x58] sm:$0xff]
  %v26 = vld [vmem:[%s0 + $0x60] sm:$0xff]
  %v27 = vld [vmem:[%s0 + $0x68] sm:$0xff]
  %v28 = vld [vmem:[%s0 + $0x70] sm:$0xff]
  %v29 = vld [vmem:[%s0 + $0x78] sm:$0xff]
  %v30 = vld [vmem:[%s0 + $0x80] sm:$0xff]
  %v31 = vld [vmem:[%s0 + $0x88] sm:$0xff]
  %v32 = vld [vmem:[%s0 + $0x90] sm:$0xff]
  %v33 = vld [vmem:[%s0 + $0x98] sm:$0xff]
  %v34 = vld [vmem:[%s0 + $0xa0] sm:$0xff]
  %v35 = vld [vmem:[%s0 + $0xa8] sm:$0xff]
  %v36 = vld [vmem:[%s0 + $0xb0] sm:$0xff]
  %v37 = vld [vmem:[%s0 + $0xb8] sm:$0xff]
  %v38 = vld [vmem:[%s0 + $0xc0] sm:$0xff]
  %v39 = vld [vmem:[%s0 + $0xc8] sm:$0xff]
  %v40 = vld [vmem:[%s0 + $0xd0] sm:$0xff]
  %v41 = vld [vmem:[%s0 + $0xd8] sm:$0xff]
  %v42 = vld [vmem:[%s0 + $0xe0] sm:$0xff]
  %v43 = vld [vmem:[%s0 + $0xe8] sm:$0xff]
  %v44 = vld [vmem:[%s0 + $0xf0] sm:$0xff]
  %v45 = vld [vmem:[%s0 + $0xf8] sm:$0xff]
  %v46 = vld [vmem:[%s0 + $0x100] sm:$0xff]
  %v47 = vld [vmem:[%s0 + $0x108] sm:$0xff]
  %v48 = vld [vmem:[%s0 + $0x110] sm:$0xff]
  %v49 = vld [vmem:[%s0 + $0x118] sm:$0xff]
  %v50 = vld [vmem:[%s0 + $0x120] sm:$0xff]
  %v51 = vld [vmem:[%s0 + $0x128] sm:$0xff]
  %v52 = vld [vmem:[%s0 + $0x130] sm:$0xff]
  %v53 = vld [vmem:[%s0 + $0x138] sm:$0xff]
  %v54 = vld [vmem:[%s0 + $0x140] sm:$0xff]
  %v55 = vld [vmem:[%s0 + $0x148] sm:$0xff]
  %v56 = vld [vmem:[%s0 + $0x150] sm:$0xff]
  %v57 = vld [vmem:[%s0 + $0x158] sm:$0xff]
  %v58 = vld [vmem:[%s0 + $0x160] sm:$0xff]
  %v59 = vld [vmem:[%s0 + $0x168] sm:$0xff]
  %v60 = vld [vmem:[%s0 + $0x170] sm:$0xff]
  %v61 = vld [vmem:[%s0 + $0x178] sm:$0xff]
  %v62 = vld [vmem:[%s0 + $0x180] sm:$0xff]
  %v63 = vld [vmem:[%s0 + $0x188] sm:$0xff]
  %v64 = vld [vmem:[%s0 + $0x190] sm:$0xff]
  %v65 = vld [vmem:[%s0 + $0x198] sm:$0xff]
  %v66 = vld [vmem:[%s0 + $0x1a0] sm:$0xff]
  %v67 = vld [vmem:[%s0 + $0x1a8] sm:$0xff]
  %v68 = vld [vmem:[%s0 + $0x1b0] sm:$0xff]
  %v69 = vld [vmem:[%s0 + $0x1b8] sm:$0xff]
  %v70 = vld [vmem:[%s0 + $0x1c0] sm:$0xff]
  %v71 = vld [vmem:[%s0 + $0x1c8] sm:$0xff]
  %v72 = vld [vmem:[%s0 + $0x1d0] sm:$0xff]
  %v73 = vld [vmem:[%s0 + $0x1d8] sm:$0xff]
  %v74 = vld [vmem:[%s0 + $0x1e0] sm:$0xff]
  %v75 = vld [vmem:[%s0 + $0x1e8] sm:$0xff]
  %v76 = vld [vmem:[%s0 + $0x1f0] sm:$0xff]
  %v77 = vld [vmem:[%s0 + $0x1f8] sm:$0xff]
  %v78 = vld [vmem:[%s0 + $0x200] sm:$0xff]
  %v79 = vld [vmem:[%s0 + $0x208] sm:$0xff]
  %v80 = vadd.f32 %v14, %v15
  %81 = vadd.xlane.f32.xlu0 %v80
  %v82 = vpop.xlane.xlu0 %81
  %v83 = vadd.f32 %v16, %v17
  %84 = vadd.xlane.f32.xlu0 %v83
  %v85 = vpop.xlane.xlu0 %84
  %v86 = vadd.f32 %v18, %v19
  %87 = vadd.xlane.f32.xlu0 %v86
  %v88 = vpop.xlane.xlu0 %87
  %v89 = vadd.f32 %v20, %v21
  %90 = vadd.xlane.f32.xlu0 %v89
  %v91 = vpop.xlane.xlu0 %90
  %v92 = vadd.f32 %v22, %v23
  %93 = vadd.xlane.f32.xlu0 %v92
  %v94 = vpop.xlane.xlu0 %93
  %v95 = vadd.f32 %v24, %v25
  %96 = vadd.xlane.f32.xlu0 %v95
  %v97 = vpop.xlane.xlu0 %96
  %v98 = vadd.f32 %v26, %v27
  %99 = vadd.xlane.f32.xlu0 %v98
  %v100 = vpop.xlane.xlu0 %99
  %v101 = vadd.f32 %v28, %v29
  %102 = vadd.xlane.f32.xlu0 %v101
  %v103 = vpop.xlane.xlu0 %102
  %v104 = vadd.f32 %v30, %v31
  %105 = vadd.xlane.f32.xlu0 %v104
  %v106 = vpop.xlane.xlu0 %105
  %v107 = vadd.f32 %v32, %v33
  %108 = vadd.xlane.f32.xlu0 %v107
  %v109 = vpop.xlane.xlu0 %108
  %v110 = vadd.f32 %v34, %v35
  %111 = vadd.xlane.f32.xlu0 %v110
  %v112 = vpop.xlane.xlu0 %111
  %v113 = vadd.f32 %v36, %v37
  %114 = vadd.xlane.f32.xlu0 %v113
  %v115 = vpop.xlane.xlu0 %114
  %v116 = vadd.f32 %v38, %v39
  %117 = vadd.xlane.f32.xlu0 %v116
  %v118 = vpop.xlane.xlu0 %117
  %v119 = vadd.f32 %v40, %v41
  %120 = vadd.xlane.f32.xlu0 %v119
  %v121 = vpop.xlane.xlu0 %120
  %v122 = vadd.f32 %v42, %v43
  %123 = vadd.xlane.f32.xlu0 %v122
  %v124 = vpop.xlane.xlu0 %123
  %v125 = vadd.f32 %v44, %v45
  %126 = vadd.xlane.f32.xlu0 %v125
  %v127 = vpop.xlane.xlu0 %126
  %v128 = vadd.f32 %v46, %v47
  %129 = vadd.xlane.f32.xlu0 %v128
  %v130 = vpop.xlane.xlu0 %129
  %v131 = vadd.f32 %v48, %v49
  %132 = vadd.xlane.f32.xlu0 %v131
  %v133 = vpop.xlane.xlu0 %132
  %v134 = vadd.f32 %v50, %v51
  %135 = vadd.xlane.f32.xlu0 %v134
  %v136 = vpop.xlane.xlu0 %135
  %v137 = vadd.f32 %v52, %v53
  %138 = vadd.xlane.f32.xlu0 %v137
  %v139 = vpop.xlane.xlu0 %138
  %v140 = vadd.f32 %v54, %v55
  %141 = vadd.xlane.f32.xlu0 %v140
  %v142 = vpop.xlane.xlu0 %141
  %v143 = vadd.f32 %v56, %v57
  %144 = vadd.xlane.f32.xlu0 %v143
  %v145 = vpop.xlane.xlu0 %144
  %v146 = vadd.f32 %v58, %v59
  %147 = vadd.xlane.f32.xlu0 %v146
  %v148 = vpop.xlane.xlu0 %147
  %v149 = vadd.f32 %v60, %v61
  %150 = vadd.xlane.f32.xlu0 %v149
  %v151 = vpop.xlane.xlu0 %150
  %v152 = vadd.f32 %v62, %v63
  %153 = vadd.xlane.f32.xlu0 %v152
  %v154 = vpop.xlane.xlu0 %153
  %v155 = vadd.f32 %v64, %v65
  %156 = vadd.xlane.f32.xlu0 %v155
  %v157 = vpop.xlane.xlu0 %156
  %v158 = vadd.f32 %v66, %v67
  %159 = vadd.xlane.f32.xlu0 %v158
  %v160 = vpop.xlane.xlu0 %159
  %v161 = vadd.f32 %v68, %v69
  %162 = vadd.xlane.f32.xlu0 %v161
  %v163 = vpop.xlane.xlu0 %162
  %v164 = vadd.f32 %v70, %v71
  %165 = vadd.xlane.f32.xlu0 %v164
  %v166 = vpop.xlane.xlu0 %165
  %v167 = vadd.f32 %v72, %v73
  %168 = vadd.xlane.f32.xlu0 %v167
  %v169 = vpop.xlane.xlu0 %168
  %v170 = vadd.f32 %v74, %v75
  %171 = vadd.xlane.f32.xlu0 %v170
  %v172 = vpop.xlane.xlu0 %171
  %v173 = vadd.f32 %v76, %v77
  %174 = vadd.xlane.f32.xlu0 %v173
  %v175 = vpop.xlane.xlu0 %174
  %v176 = vadd.f32 %v78, %v79
  %177 = vadd.xlane.f32.xlu0 %v176
  %v178 = vpop.xlane.xlu0 %177
  %v179 = vmul.f32 %v82, 0.00390625
  %v180 = vmul.f32 %v85, 0.00390625
  %v181 = vmul.f32 %v88, 0.00390625
  %v182 = vmul.f32 %v91, 0.00390625
  %v183 = vmul.f32 %v94, 0.00390625
  %v184 = vmul.f32 %v97, 0.00390625
  %v185 = vmul.f32 %v100, 0.00390625
  %v186 = vmul.f32 %v103, 0.00390625
  %v187 = vmul.f32 %v106, 0.00390625
  %v188 = vmul.f32 %v109, 0.00390625
  %v189 = vmul.f32 %v112, 0.00390625
  %v190 = vmul.f32 %v115, 0.00390625
  %v191 = vmul.f32 %v118, 0.00390625
  %v192 = vmul.f32 %v121, 0.00390625
  %v193 = vmul.f32 %v124, 0.00390625
  %v194 = vmul.f32 %v127, 0.00390625
  %v195 = vmul.f32 %v130, 0.00390625
  %v196 = vmul.f32 %v133, 0.00390625
  %v197 = vmul.f32 %v136, 0.00390625
  %v198 = vmul.f32 %v139, 0.00390625
  %v199 = vmul.f32 %v142, 0.00390625
  %v200 = vmul.f32 %v145, 0.00390625
  %v201 = vmul.f32 %v148, 0.00390625
  %v202 = vmul.f32 %v151, 0.00390625
  %v203 = vmul.f32 %v154, 0.00390625
  %v204 = vmul.f32 %v157, 0.00390625
  %v205 = vmul.f32 %v160, 0.00390625
  %v206 = vmul.f32 %v163, 0.00390625
  %v207 = vmul.f32 %v166, 0.00390625
  %v208 = vmul.f32 %v169, 0.00390625
  %v209 = vmul.f32 %v172, 0.00390625
  %v210 = vmul.f32 %v175, 0.00390625
  %v211 = vmul.f32 %v178, 0.00390625
  %v212 = vsub.f32 %v14, %v179
  %v213 = vsub.f32 %v15, %v179
  %v214 = vsub.f32 %v16, %v180
  %v215 = vsub.f32 %v17, %v180
  %v216 = vsub.f32 %v18, %v181
  %v217 = vsub.f32 %v19, %v181
  %v218 = vsub.f32 %v20, %v182
  %v219 = vsub.f32 %v21, %v182
  %v220 = vsub.f32 %v22, %v183
  %v221 = vsub.f32 %v23, %v183
  %v222 = vsub.f32 %v24, %v184
  %v223 = vsub.f32 %v25, %v184
  %v224 = vsub.f32 %v26, %v185
  %v225 = vsub.f32 %v27, %v185
  %v226 = vsub.f32 %v28, %v186
  %v227 = vsub.f32 %v29, %v186
  %v228 = vsub.f32 %v30, %v187
  %v229 = vsub.f32 %v31, %v187
  %v230 = vsub.f32 %v32, %v188
  %v231 = vsub.f32 %v33, %v188
  %v232 = vsub.f32 %v34, %v189
  %v233 = vsub.f32 %v35, %v189
  %v234 = vsub.f32 %v36, %v190
  %v235 = vsub.f32 %v37, %v190
  %v236 = vsub.f32 %v38, %v191
  %v237 = vsub.f32 %v39, %v191
  %v238 = vsub.f32 %v40, %v192
  %v239 = vsub.f32 %v41, %v192
  %v240 = vsub.f32 %v42, %v193
  %v241 = vsub.f32 %v43, %v193
  %v242 = vsub.f32 %v44, %v194
  %v243 = vsub.f32 %v45, %v194
  %v244 = vsub.f32 %v46, %v195
  %v245 = vsub.f32 %v47, %v195
  %v246 = vsub.f32 %v48, %v196
  %v247 = vsub.f32 %v49, %v196
  %v248 = vsub.f32 %v50, %v197
  %v249 = vsub.f32 %v51, %v197
  %v250 = vsub.f32 %v52, %v198
  %v251 = vsub.f32 %v53, %v198
  %v252 = vsub.f32 %v54, %v199
  %v253 = vsub.f32 %v55, %v199
  %v254 = vsub.f32 %v56, %v200
  %v255 = vsub.f32 %v57, %v200
  %v256 = vsub.f32 %v58, %v201
  %v257 = vsub.f32 %v59, %v201
  %v258 = vsub.f32 %v60, %v202
  %v259 = vsub.f32 %v61, %v202
  %v260 = vsub.f32 %v62, %v203
  %v261 = vsub.f32 %v63, %v203
  %v262 = vsub.f32 %v64, %v204
  %v263 = vsub.f32 %v65, %v204
  %v264 = vsub.f32 %v66, %v205
  %v265 = vsub.f32 %v67, %v205
  %v266 = vsub.f32 %v68, %v206
  %v267 = vsub.f32 %v69, %v206
  %v268 = vsub.f32 %v70, %v207
  %v269 = vsub.f32 %v71, %v207
  %v270 = vsub.f32 %v72, %v208
  %v271 = vsub.f32 %v73, %v208
  %v272 = vsub.f32 %v74, %v209
  %v273 = vsub.f32 %v75, %v209
  %v274 = vsub.f32 %v76, %v210
  %v275 = vsub.f32 %v77, %v210
  %v276 = vsub.f32 %v78, %v211
  %v277 = vsub.f32 %v79, %v211
  %v278 = vmul.f32 %v212, %v212
  %v279 = vmul.f32 %v213, %v213
  %v280 = vmul.f32 %v214, %v214
  %v281 = vmul.f32 %v215, %v215
  %v282 = vmul.f32 %v216, %v216
  %v283 = vmul.f32 %v217, %v217
  %v284 = vmul.f32 %v218, %v218
  %v285 = vmul.f32 %v219, %v219
  %v286 = vmul.f32 %v220, %v220
  %v287 = vmul.f32 %v221, %v221
  %v288 = vmul.f32 %v222, %v222
  %v289 = vmul.f32 %v223, %v223
  %v290 = vmul.f32 %v224, %v224
  %v291 = vmul.f32 %v225, %v225
  %v292 = vmul.f32 %v226, %v226
  %v293 = vmul.f32 %v227, %v227
  %v294 = vmul.f32 %v228, %v228
  %v295 = vmul.f32 %v229, %v229
  %v296 = vmul.f32 %v230, %v230
  %v297 = vmul.f32 %v231, %v231
  %v298 = vmul.f32 %v232, %v232
  %v299 = vmul.f32 %v233, %v233
  %v300 = vmul.f32 %v234, %v234
  %v301 = vmul.f32 %v235, %v235
  %v302 = vmul.f32 %v236, %v236
  %v303 = vmul.f32 %v237, %v237
  %v304 = vmul.f32 %v238, %v238
  %v305 = vmul.f32 %v239, %v239
  %v306 = vmul.f32 %v240, %v240
  %v307 = vmul.f32 %v241, %v241
  %v308 = vmul.f32 %v242, %v242
  %v309 = vmul.f32 %v243, %v243
  %v310 = vmul.f32 %v244, %v244
  %v311 = vmul.f32 %v245, %v245
  %v312 = vmul.f32 %v246, %v246
  %v313 = vmul.f32 %v247, %v247
  %v314 = vmul.f32 %v248, %v248
  %v315 = vmul.f32 %v249, %v249
  %v316 = vmul.f32 %v250, %v250
  %v317 = vmul.f32 %v251, %v251
  %v318 = vmul.f32 %v252, %v252
  %v319 = vmul.f32 %v253, %v253
  %v320 = vmul.f32 %v254, %v254
  %v321 = vmul.f32 %v255, %v255
  %v322 = vmul.f32 %v256, %v256
  %v323 = vmul.f32 %v257, %v257
  %v324 = vmul.f32 %v258, %v258
  %v325 = vmul.f32 %v259, %v259
  %v326 = vmul.f32 %v260, %v260
  %v327 = vmul.f32 %v261, %v261
  %v328 = vmul.f32 %v262, %v262
  %v329 = vmul.f32 %v263, %v263
  %v330 = vmul.f32 %v264, %v264
  %v331 = vmul.f32 %v265, %v265
  %v332 = vmul.f32 %v266, %v266
  %v333 = vmul.f32 %v267, %v267
  %v334 = vmul.f32 %v268, %v268
  %v335 = vmul.f32 %v269, %v269
  %v336 = vmul.f32 %v270, %v270
  %v337 = vmul.f32 %v271, %v271
  %v338 = vmul.f32 %v272, %v272
  %v339 = vmul.f32 %v273, %v273
  %v340 = vmul.f32 %v274, %v274
  %v341 = vmul.f32 %v275, %v275
  %v342 = vmul.f32 %v276, %v276
  %v343 = vmul.f32 %v277, %v277
  %v344 = vadd.f32 %v278, %v279
  %345 = vadd.xlane.f32.xlu0 %v344
  %v346 = vpop.xlane.xlu0 %345
  %v347 = vadd.f32 %v280, %v281
  %348 = vadd.xlane.f32.xlu0 %v347
  %v349 = vpop.xlane.xlu0 %348
  %v350 = vadd.f32 %v282, %v283
  %351 = vadd.xlane.f32.xlu0 %v350
  %v352 = vpop.xlane.xlu0 %351
  %v353 = vadd.f32 %v284, %v285
  %354 = vadd.xlane.f32.xlu0 %v353
  %v355 = vpop.xlane.xlu0 %354
  %v356 = vadd.f32 %v286, %v287
  %357 = vadd.xlane.f32.xlu0 %v356
  %v358 = vpop.xlane.xlu0 %357
  %v359 = vadd.f32 %v288, %v289
  %360 = vadd.xlane.f32.xlu0 %v359
  %v361 = vpop.xlane.xlu0 %360
  %v362 = vadd.f32 %v290, %v291
  %363 = vadd.xlane.f32.xlu0 %v362
  %v364 = vpop.xlane.xlu0 %363
  %v365 = vadd.f32 %v292, %v293
  %366 = vadd.xlane.f32.xlu0 %v365
  %v367 = vpop.xlane.xlu0 %366
  %v368 = vadd.f32 %v294, %v295
  %369 = vadd.xlane.f32.xlu0 %v368
  %v370 = vpop.xlane.xlu0 %369
  %v371 = vadd.f32 %v296, %v297
  %372 = vadd.xlane.f32.xlu0 %v371
  %v373 = vpop.xlane.xlu0 %372
  %v374 = vadd.f32 %v298, %v299
  %375 = vadd.xlane.f32.xlu0 %v374
  %v376 = vpop.xlane.xlu0 %375
  %v377 = vadd.f32 %v300, %v301
  %378 = vadd.xlane.f32.xlu0 %v377
  %v379 = vpop.xlane.xlu0 %378
  %v380 = vadd.f32 %v302, %v303
  %381 = vadd.xlane.f32.xlu0 %v380
  %v382 = vpop.xlane.xlu0 %381
  %v383 = vadd.f32 %v304, %v305
  %384 = vadd.xlane.f32.xlu0 %v383
  %v385 = vpop.xlane.xlu0 %384
  %v386 = vadd.f32 %v306, %v307
  %387 = vadd.xlane.f32.xlu0 %v386
  %v388 = vpop.xlane.xlu0 %387
  %v389 = vadd.f32 %v308, %v309
  %390 = vadd.xlane.f32.xlu0 %v389
  %v391 = vpop.xlane.xlu0 %390
  %v392 = vadd.f32 %v310, %v311
  %393 = vadd.xlane.f32.xlu0 %v392
  %v394 = vpop.xlane.xlu0 %393
  %v395 = vadd.f32 %v312, %v313
  %396 = vadd.xlane.f32.xlu0 %v395
  %v397 = vpop.xlane.xlu0 %396
  %v398 = vadd.f32 %v314, %v315
  %399 = vadd.xlane.f32.xlu0 %v398
  %v400 = vpop.xlane.xlu0 %399
  %v401 = vadd.f32 %v316, %v317
  %402 = vadd.xlane.f32.xlu0 %v401
  %v403 = vpop.xlane.xlu0 %402
  %v404 = vadd.f32 %v318, %v319
  %405 = vadd.xlane.f32.xlu0 %v404
  %v406 = vpop.xlane.xlu0 %405
  %v407 = vadd.f32 %v320, %v321
  %408 = vadd.xlane.f32.xlu0 %v407
  %v409 = vpop.xlane.xlu0 %408
  %v410 = vadd.f32 %v322, %v323
  %411 = vadd.xlane.f32.xlu0 %v410
  %v412 = vpop.xlane.xlu0 %411
  %v413 = vadd.f32 %v324, %v325
  %414 = vadd.xlane.f32.xlu0 %v413
  %v415 = vpop.xlane.xlu0 %414
  %v416 = vadd.f32 %v326, %v327
  %417 = vadd.xlane.f32.xlu0 %v416
  %v418 = vpop.xlane.xlu0 %417
  %v419 = vadd.f32 %v328, %v329
  %420 = vadd.xlane.f32.xlu0 %v419
  %v421 = vpop.xlane.xlu0 %420
  %v422 = vadd.f32 %v330, %v331
  %423 = vadd.xlane.f32.xlu0 %v422
  %v424 = vpop.xlane.xlu0 %423
  %v425 = vadd.f32 %v332, %v333
  %426 = vadd.xlane.f32.xlu0 %v425
  %v427 = vpop.xlane.xlu0 %426
  %v428 = vadd.f32 %v334, %v335
  %429 = vadd.xlane.f32.xlu0 %v428
  %v430 = vpop.xlane.xlu0 %429
  %v431 = vadd.f32 %v336, %v337
  %432 = vadd.xlane.f32.xlu0 %v431
  %v433 = vpop.xlane.xlu0 %432
  %v434 = vadd.f32 %v338, %v339
  %435 = vadd.xlane.f32.xlu0 %v434
  %v436 = vpop.xlane.xlu0 %435
  %v437 = vadd.f32 %v340, %v341
  %438 = vadd.xlane.f32.xlu0 %v437
  %v439 = vpop.xlane.xlu0 %438
  %v440 = vadd.f32 %v342, %v343
  %441 = vadd.xlane.f32.xlu0 %v440
  %v442 = vpop.xlane.xlu0 %441
  %v443 = vmul.f32 %v346, 0.00390625
  %v444 = vmul.f32 %v349, 0.00390625
  %v445 = vmul.f32 %v352, 0.00390625
  %v446 = vmul.f32 %v355, 0.00390625
  %v447 = vmul.f32 %v358, 0.00390625
  %v448 = vmul.f32 %v361, 0.00390625
  %v449 = vmul.f32 %v364, 0.00390625
  %v450 = vmul.f32 %v367, 0.00390625
  %v451 = vmul.f32 %v370, 0.00390625
  %v452 = vmul.f32 %v373, 0.00390625
  %v453 = vmul.f32 %v376, 0.00390625
  %v454 = vmul.f32 %v379, 0.00390625
  %v455 = vmul.f32 %v382, 0.00390625
  %v456 = vmul.f32 %v385, 0.00390625
  %v457 = vmul.f32 %v388, 0.00390625
  %v458 = vmul.f32 %v391, 0.00390625
  %v459 = vmul.f32 %v394, 0.00390625
  %v460 = vmul.f32 %v397, 0.00390625
  %v461 = vmul.f32 %v400, 0.00390625
  %v462 = vmul.f32 %v403, 0.00390625
  %v463 = vmul.f32 %v406, 0.00390625
  %v464 = vmul.f32 %v409, 0.00390625
  %v465 = vmul.f32 %v412, 0.00390625
  %v466 = vmul.f32 %v415, 0.00390625
  %v467 = vmul.f32 %v418, 0.00390625
  %v468 = vmul.f32 %v421, 0.00390625
  %v469 = vmul.f32 %v424, 0.00390625
  %v470 = vmul.f32 %v427, 0.00390625
  %v471 = vmul.f32 %v430, 0.00390625
  %v472 = vmul.f32 %v433, 0.00390625
  %v473 = vmul.f32 %v436, 0.00390625
  %v474 = vmul.f32 %v439, 0.00390625
  %v475 = vmul.f32 %v442, 0.00390625
  %v476 = vadd.f32 %v443, 1e-12
  %v477 = vadd.f32 %v444, 1e-12
  %v478 = vadd.f32 %v445, 1e-12
  %v479 = vadd.f32 %v446, 1e-12
  %v480 = vadd.f32 %v447, 1e-12
  %v481 = vadd.f32 %v448, 1e-12
  %v482 = vadd.f32 %v449, 1e-12
  %v483 = vadd.f32 %v450, 1e-12
  %v484 = vadd.f32 %v451, 1e-12
  %v485 = vadd.f32 %v452, 1e-12
  %v486 = vadd.f32 %v453, 1e-12
  %v487 = vadd.f32 %v454, 1e-12
  %v488 = vadd.f32 %v455, 1e-12
  %v489 = vadd.f32 %v456, 1e-12
  %v490 = vadd.f32 %v457, 1e-12
  %v491 = vadd.f32 %v458, 1e-12
  %v492 = vadd.f32 %v459, 1e-12
  %v493 = vadd.f32 %v460, 1e-12
  %v494 = vadd.f32 %v461, 1e-12
  %v495 = vadd.f32 %v462, 1e-12
  %v496 = vadd.f32 %v463, 1e-12
  %v497 = vadd.f32 %v464, 1e-12
  %v498 = vadd.f32 %v465, 1e-12
  %v499 = vadd.f32 %v466, 1e-12
  %v500 = vadd.f32 %v467, 1e-12
  %v501 = vadd.f32 %v468, 1e-12
  %v502 = vadd.f32 %v469, 1e-12
  %v503 = vadd.f32 %v470, 1e-12
  %v504 = vadd.f32 %v471, 1e-12
  %v505 = vadd.f32 %v472, 1e-12
  %v506 = vadd.f32 %v473, 1e-12
  %v507 = vadd.f32 %v474, 1e-12
  %v508 = vadd.f32 %v475, 1e-12
  %v509 = vrsqrt.pop %v476
  %v510 = vrsqrt.pop %v477
  %v511 = vrsqrt.pop %v478
  %v512 = vrsqrt.pop %v479
  %v513 = vrsqrt.pop %v480
  %v514 = vrsqrt.pop %v481
  %v515 = vrsqrt.pop %v482
  %v516 = vrsqrt.pop %v483
  %v517 = vrsqrt.pop %v484
  %v518 = vrsqrt.pop %v485
  %v519 = vrsqrt.pop %v486
  %v520 = vrsqrt.pop %v487
  %v521 = vrsqrt.pop %v488
  %v522 = vrsqrt.pop %v489
  %v523 = vrsqrt.pop %v490
  %v524 = vrsqrt.pop %v491
  %v525 = vrsqrt.pop %v492
  %v526 = vrsqrt.pop %v493
  %v527 = vrsqrt.pop %v494
  %v528 = vrsqrt.pop %v495
  %v529 = vrsqrt.pop %v496
  %v530 = vrsqrt.pop %v497
  %v531 = vrsqrt.pop %v498
  %v532 = vrsqrt.pop %v499
  %v533 = vrsqrt.pop %v500
  %v534 = vrsqrt.pop %v501
  %v535 = vrsqrt.pop %v502
  %v536 = vrsqrt.pop %v503
  %v537 = vrsqrt.pop %v504
  %v538 = vrsqrt.pop %v505
  %v539 = vrsqrt.pop %v506
  %v540 = vrsqrt.pop %v507
  %v541 = vrsqrt.pop %v508
  %v542 = vmul.f32 %v212, %v509
  %v543 = vmul.f32 %v213, %v509
  %v544 = vmul.f32 %v214, %v510
  %v545 = vmul.f32 %v215, %v510
  %v546 = vmul.f32 %v216, %v511
  %v547 = vmul.f32 %v217, %v511
  %v548 = vmul.f32 %v218, %v512
  %v549 = vmul.f32 %v219, %v512
  %v550 = vmul.f32 %v220, %v513
  %v551 = vmul.f32 %v221, %v513
  %v552 = vmul.f32 %v222, %v514
  %v553 = vmul.f32 %v223, %v514
  %v554 = vmul.f32 %v224, %v515
  %v555 = vmul.f32 %v225, %v515
  %v556 = vmul.f32 %v226, %v516
  %v557 = vmul.f32 %v227, %v516
  %v558 = vmul.f32 %v228, %v517
  %v559 = vmul.f32 %v229, %v517
  %v560 = vmul.f32 %v230, %v518
  %v561 = vmul.f32 %v231, %v518
  %v562 = vmul.f32 %v232, %v519
  %v563 = vmul.f32 %v233, %v519
  %v564 = vmul.f32 %v234, %v520
  %v565 = vmul.f32 %v235, %v520
  %v566 = vmul.f32 %v236, %v521
  %v567 = vmul.f32 %v237, %v521
  %v568 = vmul.f32 %v238, %v522
  %v569 = vmul.f32 %v239, %v522
  %v570 = vmul.f32 %v240, %v523
  %v571 = vmul.f32 %v241, %v523
  %v572 = vmul.f32 %v242, %v524
  %v573 = vmul.f32 %v243, %v524
  %v574 = vmul.f32 %v244, %v525
  %v575 = vmul.f32 %v245, %v525
  %v576 = vmul.f32 %v246, %v526
  %v577 = vmul.f32 %v247, %v526
  %v578 = vmul.f32 %v248, %v527
  %v579 = vmul.f32 %v249, %v527
  %v580 = vmul.f32 %v250, %v528
  %v581 = vmul.f32 %v251, %v528
  %v582 = vmul.f32 %v252, %v529
  %v583 = vmul.f32 %v253, %v529
  %v584 = vmul.f32 %v254, %v530
  %v585 = vmul.f32 %v255, %v530
  %v586 = vmul.f32 %v256, %v531
  %v587 = vmul.f32 %v257, %v531
  %v588 = vmul.f32 %v258, %v532
  %v589 = vmul.f32 %v259, %v532
  %v590 = vmul.f32 %v260, %v533
  %v591 = vmul.f32 %v261, %v533
  %v592 = vmul.f32 %v262, %v534
  %v593 = vmul.f32 %v263, %v534
  %v594 = vmul.f32 %v264, %v535
  %v595 = vmul.f32 %v265, %v535
  %v596 = vmul.f32 %v266, %v536
  %v597 = vmul.f32 %v267, %v536
  %v598 = vmul.f32 %v268, %v537
  %v599 = vmul.f32 %v269, %v537
  %v600 = vmul.f32 %v270, %v538
  %v601 = vmul.f32 %v271, %v538
  %v602 = vmul.f32 %v272, %v539
  %v603 = vmul.f32 %v273, %v539
  %v604 = vmul.f32 %v274, %v540
  %v605 = vmul.f32 %v275, %v540
  %v606 = vmul.f32 %v276, %v541
  %v607 = vmul.f32 %v277, %v541
  %v608 = vld [vmem:[%s1] sm:$0x3]
  %v609 = vld [vmem:[%s2] sm:$0x3]
  %v611 = vlaneseq
  %v612 = vshrl.u32 %v611, 7
  %v613 = vsub.s32 0, %v612
  %v614 = vrot.slane %v608, %v613
  %v615 = vlaneseq
  %v616 = vshrl.u32 %v615, 7
  %v617 = vsub.s32 1, %v616
  %v618 = vrot.slane %v608, %v617
  %v621 = vmul.f32 %v614, %v542
  %v622 = vmul.f32 %v618, %v543
  %v623 = vmul.f32 %v614, %v544
  %v624 = vmul.f32 %v618, %v545
  %v625 = vmul.f32 %v614, %v546
  %v626 = vmul.f32 %v618, %v547
  %v627 = vmul.f32 %v614, %v548
  %v628 = vmul.f32 %v618, %v549
  %v629 = vmul.f32 %v614, %v550
  %v630 = vmul.f32 %v618, %v551
  %v631 = vmul.f32 %v614, %v552
  %v632 = vmul.f32 %v618, %v553
  %v633 = vmul.f32 %v614, %v554
  %v634 = vmul.f32 %v618, %v555
  %v635 = vmul.f32 %v614, %v556
  %v636 = vmul.f32 %v618, %v557
  %v637 = vmul.f32 %v614, %v558
  %v638 = vmul.f32 %v618, %v559
  %v639 = vmul.f32 %v614, %v560
  %v640 = vmul.f32 %v618, %v561
  %v641 = vmul.f32 %v614, %v562
  %v642 = vmul.f32 %v618, %v563
  %v643 = vmul.f32 %v614, %v564
  %v644 = vmul.f32 %v618, %v565
  %v645 = vmul.f32 %v614, %v566
  %v646 = vmul.f32 %v618, %v567
  %v647 = vmul.f32 %v614, %v568
  %v648 = vmul.f32 %v618, %v569
  %v649 = vmul.f32 %v614, %v570
  %v650 = vmul.f32 %v618, %v571
  %v651 = vmul.f32 %v614, %v572
  %v652 = vmul.f32 %v618, %v573
  %v653 = vmul.f32 %v614, %v574
  %v654 = vmul.f32 %v618, %v575
  %v655 = vmul.f32 %v614, %v576
  %v656 = vmul.f32 %v618, %v577
  %v657 = vmul.f32 %v614, %v578
  %v658 = vmul.f32 %v618, %v579
  %v659 = vmul.f32 %v614, %v580
  %v660 = vmul.f32 %v618, %v581
  %v661 = vmul.f32 %v614, %v582
  %v662 = vmul.f32 %v618, %v583
  %v663 = vmul.f32 %v614, %v584
  %v664 = vmul.f32 %v618, %v585
  %v665 = vmul.f32 %v614, %v586
  %v666 = vmul.f32 %v618, %v587
  %v667 = vmul.f32 %v614, %v588
  %v668 = vmul.f32 %v618, %v589
  %v669 = vmul.f32 %v614, %v590
  %v670 = vmul.f32 %v618, %v591
  %v671 = vmul.f32 %v614, %v592
  %v672 = vmul.f32 %v618, %v593
  %v673 = vmul.f32 %v614, %v594
  %v674 = vmul.f32 %v618, %v595
  %v675 = vmul.f32 %v614, %v596
  %v676 = vmul.f32 %v618, %v597
  %v677 = vmul.f32 %v614, %v598
  %v678 = vmul.f32 %v618, %v599
  %v679 = vmul.f32 %v614, %v600
  %v680 = vmul.f32 %v618, %v601
  %v681 = vmul.f32 %v614, %v602
  %v682 = vmul.f32 %v618, %v603
  %v683 = vmul.f32 %v614, %v604
  %v684 = vmul.f32 %v618, %v605
  %v685 = vmul.f32 %v614, %v606
  %v686 = vmul.f32 %v618, %v607
  %v688 = vlaneseq
  %v689 = vshrl.u32 %v688, 7
  %v690 = vsub.s32 0, %v689
  %v691 = vrot.slane %v609, %v690
  %v692 = vlaneseq
  %v693 = vshrl.u32 %v692, 7
  %v694 = vsub.s32 1, %v693
  %v695 = vrot.slane %v609, %v694
  %v698 = vadd.f32 %v621, %v691
  %v699 = vadd.f32 %v622, %v695
  %v700 = vadd.f32 %v623, %v691
  %v701 = vadd.f32 %v624, %v695
  %v702 = vadd.f32 %v625, %v691
  %v703 = vadd.f32 %v626, %v695
  %v704 = vadd.f32 %v627, %v691
  %v705 = vadd.f32 %v628, %v695
  %v706 = vadd.f32 %v629, %v691
  %v707 = vadd.f32 %v630, %v695
  %v708 = vadd.f32 %v631, %v691
  %v709 = vadd.f32 %v632, %v695
  %v710 = vadd.f32 %v633, %v691
  %v711 = vadd.f32 %v634, %v695
  %v712 = vadd.f32 %v635, %v691
  %v713 = vadd.f32 %v636, %v695
  %v714 = vadd.f32 %v637, %v691
  %v715 = vadd.f32 %v638, %v695
  %v716 = vadd.f32 %v639, %v691
  %v717 = vadd.f32 %v640, %v695
  %v718 = vadd.f32 %v641, %v691
  %v719 = vadd.f32 %v642, %v695
  %v720 = vadd.f32 %v643, %v691
  %v721 = vadd.f32 %v644, %v695
  %v722 = vadd.f32 %v645, %v691
  %v723 = vadd.f32 %v646, %v695
  %v724 = vadd.f32 %v647, %v691
  %v725 = vadd.f32 %v648, %v695
  %v726 = vadd.f32 %v649, %v691
  %v727 = vadd.f32 %v650, %v695
  %v728 = vadd.f32 %v651, %v691
  %v729 = vadd.f32 %v652, %v695
  %v730 = vadd.f32 %v653, %v691
  %v731 = vadd.f32 %v654, %v695
  %v732 = vadd.f32 %v655, %v691
  %v733 = vadd.f32 %v656, %v695
  %v734 = vadd.f32 %v657, %v691
  %v735 = vadd.f32 %v658, %v695
  %v736 = vadd.f32 %v659, %v691
  %v737 = vadd.f32 %v660, %v695
  %v738 = vadd.f32 %v661, %v691
  %v739 = vadd.f32 %v662, %v695
  %v740 = vadd.f32 %v663, %v691
  %v741 = vadd.f32 %v664, %v695
  %v742 = vadd.f32 %v665, %v691
  %v743 = vadd.f32 %v666, %v695
  %v744 = vadd.f32 %v667, %v691
  %v745 = vadd.f32 %v668, %v695
  %v746 = vadd.f32 %v669, %v691
  %v747 = vadd.f32 %v670, %v695
  %v748 = vadd.f32 %v671, %v691
  %v749 = vadd.f32 %v672, %v695
  %v750 = vadd.f32 %v673, %v691
  %v751 = vadd.f32 %v674, %v695
  %v752 = vadd.f32 %v675, %v691
  %v753 = vadd.f32 %v676, %v695
  %v754 = vadd.f32 %v677, %v691
  %v755 = vadd.f32 %v678, %v695
  %v756 = vadd.f32 %v679, %v691
  %v757 = vadd.f32 %v680, %v695
  %v758 = vadd.f32 %v681, %v691
  %v759 = vadd.f32 %v682, %v695
  %v760 = vadd.f32 %v683, %v691
  %v761 = vadd.f32 %v684, %v695
  %v762 = vadd.f32 %v685, %v691
  %v763 = vadd.f32 %v686, %v695
  %764 = vst [vmem:[%s3] sm:$0xff] %v698
  %765 = vst [vmem:[%s3 + $0x8] sm:$0xff] %v699
  %766 = vst [vmem:[%s3 + $0x10] sm:$0xff] %v700
  %767 = vst [vmem:[%s3 + $0x18] sm:$0xff] %v701
  %768 = vst [vmem:[%s3 + $0x20] sm:$0xff] %v702
  %769 = vst [vmem:[%s3 + $0x28] sm:$0xff] %v703
  %770 = vst [vmem:[%s3 + $0x30] sm:$0xff] %v704
  %771 = vst [vmem:[%s3 + $0x38] sm:$0xff] %v705
  %772 = vst [vmem:[%s3 + $0x40] sm:$0xff] %v706
  %773 = vst [vmem:[%s3 + $0x48] sm:$0xff] %v707
  %774 = vst [vmem:[%s3 + $0x50] sm:$0xff] %v708
  %775 = vst [vmem:[%s3 + $0x58] sm:$0xff] %v709
  %776 = vst [vmem:[%s3 + $0x60] sm:$0xff] %v710
  %777 = vst [vmem:[%s3 + $0x68] sm:$0xff] %v711
  %778 = vst [vmem:[%s3 + $0x70] sm:$0xff] %v712
  %779 = vst [vmem:[%s3 + $0x78] sm:$0xff] %v713
  %780 = vst [vmem:[%s3 + $0x80] sm:$0xff] %v714
  %781 = vst [vmem:[%s3 + $0x88] sm:$0xff] %v715
  %782 = vst [vmem:[%s3 + $0x90] sm:$0xff] %v716
  %783 = vst [vmem:[%s3 + $0x98] sm:$0xff] %v717
  %784 = vst [vmem:[%s3 + $0xa0] sm:$0xff] %v718
  %785 = vst [vmem:[%s3 + $0xa8] sm:$0xff] %v719
  %786 = vst [vmem:[%s3 + $0xb0] sm:$0xff] %v720
  %787 = vst [vmem:[%s3 + $0xb8] sm:$0xff] %v721
  %788 = vst [vmem:[%s3 + $0xc0] sm:$0xff] %v722
  %789 = vst [vmem:[%s3 + $0xc8] sm:$0xff] %v723
  %790 = vst [vmem:[%s3 + $0xd0] sm:$0xff] %v724
  %791 = vst [vmem:[%s3 + $0xd8] sm:$0xff] %v725
  %792 = vst [vmem:[%s3 + $0xe0] sm:$0xff] %v726
  %793 = vst [vmem:[%s3 + $0xe8] sm:$0xff] %v727
  %794 = vst [vmem:[%s3 + $0xf0] sm:$0xff] %v728
  %795 = vst [vmem:[%s3 + $0xf8] sm:$0xff] %v729
  %796 = vst [vmem:[%s3 + $0x100] sm:$0xff] %v730
  %797 = vst [vmem:[%s3 + $0x108] sm:$0xff] %v731
  %798 = vst [vmem:[%s3 + $0x110] sm:$0xff] %v732
  %799 = vst [vmem:[%s3 + $0x118] sm:$0xff] %v733
  %800 = vst [vmem:[%s3 + $0x120] sm:$0xff] %v734
  %801 = vst [vmem:[%s3 + $0x128] sm:$0xff] %v735
  %802 = vst [vmem:[%s3 + $0x130] sm:$0xff] %v736
  %803 = vst [vmem:[%s3 + $0x138] sm:$0xff] %v737
  %804 = vst [vmem:[%s3 + $0x140] sm:$0xff] %v738
  %805 = vst [vmem:[%s3 + $0x148] sm:$0xff] %v739
  %806 = vst [vmem:[%s3 + $0x150] sm:$0xff] %v740
  %807 = vst [vmem:[%s3 + $0x158] sm:$0xff] %v741
  %808 = vst [vmem:[%s3 + $0x160] sm:$0xff] %v742
  %809 = vst [vmem:[%s3 + $0x168] sm:$0xff] %v743
  %810 = vst [vmem:[%s3 + $0x170] sm:$0xff] %v744
  %811 = vst [vmem:[%s3 + $0x178] sm:$0xff] %v745
  %812 = vst [vmem:[%s3 + $0x180] sm:$0xff] %v746
  %813 = vst [vmem:[%s3 + $0x188] sm:$0xff] %v747
  %814 = vst [vmem:[%s3 + $0x190] sm:$0xff] %v748
  %815 = vst [vmem:[%s3 + $0x198] sm:$0xff] %v749
  %816 = vst [vmem:[%s3 + $0x1a0] sm:$0xff] %v750
  %817 = vst [vmem:[%s3 + $0x1a8] sm:$0xff] %v751
  %818 = vst [vmem:[%s3 + $0x1b0] sm:$0xff] %v752
  %819 = vst [vmem:[%s3 + $0x1b8] sm:$0xff] %v753
  %820 = vst [vmem:[%s3 + $0x1c0] sm:$0xff] %v754
  %821 = vst [vmem:[%s3 + $0x1c8] sm:$0xff] %v755
  %822 = vst [vmem:[%s3 + $0x1d0] sm:$0xff] %v756
  %823 = vst [vmem:[%s3 + $0x1d8] sm:$0xff] %v757
  %824 = vst [vmem:[%s3 + $0x1e0] sm:$0xff] %v758
  %825 = vst [vmem:[%s3 + $0x1e8] sm:$0xff] %v759
  %826 = vst [vmem:[%s3 + $0x1f0] sm:$0xff] %v760
  %827 = vst [vmem:[%s3 + $0x1f8] sm:$0xff] %v761
  %828 = vst [vmem:[%s3 + $0x200] sm:$0xff] %v762
  %829 = vst [vmem:[%s3 + $0x208] sm:$0xff] %v763
  // Predicated region
  $region14: #{_lambda_.1} parent=0 // pred_check
    _
  $region15: #{_lambda_.1} parent=0 // pred_check_branch
    %831 = sbr.rel (0) target = $region17
  $region16: #{_lambda_.1} parent=0 // pred_region
    _
  $region17: #{_lambda_.1} parent=0 // pred_fallthru
    _
  // Predicated region
  $region18: #{_lambda_.1} parent=0 // pred_check
    _
  $region19: #{_lambda_.1} parent=0 // pred_check_branch
    %833 = sbr.rel (0) target = $region21
  $region20: #{_lambda_.1} parent=0 // pred_region
    _
  $region21: #{_lambda_.1} parent=0 // pred_fallthru
    _

</llo_original>
